<compile_context>
chip_gen: v6e
topology: v6e:2x2x1
jax: 0.10.0
libtpu: 0.0.40
codegen_flags: <defaults>
</compile_context>

<pallas_src>
import jax
import jax.numpy as jnp
from jax.experimental import pallas as pl
from jax.experimental.pallas import tpu as pltpu


# ----------------------------- Pallas kernel -----------------------------

def _affine_kernel(x_ref, w_ref, b_ref, o_ref):
    # x_ref: (row_tile, lanes); w_ref/b_ref: (1, lanes) -> VPU broadcast over rows.
    x = x_ref[...]
    w = w_ref[...]
    b = b_ref[...]
    o_ref[...] = (x * w + b).astype(o_ref.dtype)


# ----------------------------- kernel wrapper -----------------------------

def _sublane_multiple(dtype):
    itemsize = jnp.dtype(dtype).itemsize
    return {4: 8, 2: 16, 1: 32}.get(itemsize, 8)


def affine_layer(x, weight, bias, *, target_rows=512, target_lanes=1024):
    """y = x * weight + bias, weight/bias shaped (dim,), broadcast on last dim."""
    dim = x.shape[-1]
    orig_shape = x.shape
    dtype = x.dtype

    # Match PyTorch semantics where params share the module dtype.
    weight = weight.astype(dtype)
    bias = bias.astype(dtype)

    x2d = x.reshape(-1, dim)
    M = x2d.shape[0]

    # --- lane widening: fold k rows into lanes (weight repeats every dim lanes) ---
    k = 1
    if dim < target_lanes and M > 1:
        k = max(1, target_lanes // dim)
        while k > 1 and (M % k != 0):
            k //= 2
    if k > 1:
        x2d = x2d.reshape(M // k, k * dim)
        w_row = jnp.tile(weight, k).reshape(1, k * dim)
        b_row = jnp.tile(bias, k).reshape(1, k * dim)
    else:
        w_row = weight.reshape(1, dim)
        b_row = bias.reshape(1, dim)

    rows, lanes = x2d.shape

    # --- dtype-aware, sublane-aligned row tile; many parallel grid steps ---
    sub = _sublane_multiple(dtype)
    row_tile = min(target_rows, rows)
    row_tile = max(sub, ((row_tile + sub - 1) // sub) * sub)

    padded_rows = pl.cdiv(rows, row_tile) * row_tile
    if padded_rows != rows:
        # Fallback for ragged row counts; the padded tail is sliced off below.
        x2d = jnp.pad(x2d, ((0, padded_rows - rows), (0, 0)))
    grid_m = padded_rows // row_tile

    itemsize = jnp.dtype(dtype).itemsize
    cost = pl.CostEstimate(
        flops=2 * rows * lanes,
        transcendentals=0,
        bytes_accessed=2 * rows * lanes * itemsize + 2 * lanes * itemsize,
    )

    out = pl.pallas_call(
        _affine_kernel,
        out_shape=jax.ShapeDtypeStruct((padded_rows, lanes), dtype),
        grid_spec=pltpu.PrefetchScalarGridSpec(
            num_scalar_prefetch=0,
            grid=(grid_m,),
            in_specs=[
                pl.BlockSpec((row_tile, lanes), lambda i: (i, 0)),
                pl.BlockSpec((1, lanes), lambda i: (0, 0)),
                pl.BlockSpec((1, lanes), lambda i: (0, 0)),
            ],
            out_specs=pl.BlockSpec((row_tile, lanes), lambda i: (i, 0)),
        ),
        compiler_params=pltpu.CompilerParams(
            dimension_semantics=("parallel",)),
        cost_estimate=cost,
    )(x2d, w_row, b_row)

    if padded_rows != rows:
        out = out[:rows]
    return out.reshape(orig_shape)


# ----------------------------- main -----------------------------

if __name__ == "__main__":
    f32 = jnp.float32
    key = jax.random.PRNGKey(0)

    # Case 1: typical lane-dense activation (batch, seq, dim) with dim=128.
    B, N, dim = 2, 256, 128
    kx, kw, kb, key = *jax.random.split(key, 3), jax.random.split(key, 4)[3]
    x = jax.random.normal(kx, (B, N, dim), dtype=f32)
    # Module initializes weight=ones, bias=zeros; perturb so the affine math is
    # actually exercised (forward semantics identical).
    weight = 1.0 + 0.1 * jax.random.normal(kw, (dim,), f32)
    bias = 0.1 * jax.random.normal(kb, (dim,), f32)

    out = jax.block_until_ready(affine_layer(x, weight, bias))
    ref = x * weight + bias
    assert out.shape == ref.shape, (out.shape, ref.shape)
    assert bool(jnp.all(jnp.isfinite(out)))
    assert bool(jnp.allclose(out, ref, rtol=1e-6, atol=1e-6))

    # Case 2: ragged shape (dim not a multiple of 128, odd row count) to
    # exercise the padding / k=1 fallback path.
    B2, N2, dim2 = 3, 37, 96
    kx2, kw2, kb2 = jax.random.split(key, 3)
    x2 = jax.random.normal(kx2, (B2, N2, dim2), dtype=f32)
    w2 = 1.0 + 0.1 * jax.random.normal(kw2, (dim2,), f32)
    b2 = 0.1 * jax.random.normal(kb2, (dim2,), f32)

    out2 = jax.block_until_ready(affine_layer(x2, w2, b2))
    ref2 = x2 * w2 + b2
    assert out2.shape == ref2.shape, (out2.shape, ref2.shape)
    assert bool(jnp.allclose(out2, ref2, rtol=1e-6, atol=1e-6))

    print("KERNEL_OK")
</pallas_src>

<mosaic_0001>
module attributes {stable_mosaic.version = 11 : i64} {
  func.func @_affine_kernel(%arg0: i32, %arg1: memref<64x1024xf32, #tpu.memory_space<vmem>>, %arg2: memref<1x1024xf32, #tpu.memory_space<vmem>>, %arg3: memref<1x1024xf32, #tpu.memory_space<vmem>>, %arg4: memref<64x1024xf32, #tpu.memory_space<vmem>>) attributes {dimension_semantics = [#tpu.dimension_semantics<parallel>], iteration_bounds = array<i64: 1>, scalar_prefetch = 0 : i64, scratch_operands = 0 : i64, tpu.core_type = #tpu.core_type<tc>, window_params = [{transform_indices = @transform_0, window_bounds = array<i64: 64, 1024>}, {pipeline_mode = #tpu.pipeline_mode<synchronous>, transform_indices = @transform_1, window_bounds = array<i64: 1, 1024>}, {pipeline_mode = #tpu.pipeline_mode<synchronous>, transform_indices = @transform_2, window_bounds = array<i64: 1, 1024>}, {transform_indices = @transform_3, window_bounds = array<i64: 64, 1024>}]} {
    %c0 = arith.constant 0 : index
    %c0_0 = arith.constant 0 : index
    %0 = vector.load %arg1[%c0, %c0_0] : memref<64x1024xf32, #tpu.memory_space<vmem>>, vector<64x1024xf32>
    %c0_1 = arith.constant 0 : index
    %c0_2 = arith.constant 0 : index
    %1 = vector.load %arg2[%c0_1, %c0_2] : memref<1x1024xf32, #tpu.memory_space<vmem>>, vector<1x1024xf32>
    %c0_3 = arith.constant 0 : index
    %c0_4 = arith.constant 0 : index
    %2 = vector.load %arg3[%c0_3, %c0_4] : memref<1x1024xf32, #tpu.memory_space<vmem>>, vector<1x1024xf32>
    %3 = vector.broadcast %1 : vector<1x1024xf32> to vector<64x1024xf32>
    %4 = arith.mulf %0, %3 : vector<64x1024xf32>
    %5 = vector.broadcast %2 : vector<1x1024xf32> to vector<64x1024xf32>
    %6 = arith.addf %4, %5 : vector<64x1024xf32>
    %c0_5 = arith.constant 0 : index
    %c0_6 = arith.constant 0 : index
    %7 = vector.load %arg4[%c0_5, %c0_6] : memref<64x1024xf32, #tpu.memory_space<vmem>>, vector<64x1024xf32>
    tpu.vector_store %arg4[%c0_5, %c0_6], %6 {strides = array<i32>} : memref<64x1024xf32, #tpu.memory_space<vmem>>, vector<64x1024xf32>,
    return
  }
  func.func @transform_0(%arg0: i32) -> (i32, i32) {
    %c0_i32 = arith.constant 0 : i32
    %c0_i32_0 = arith.constant 0 : i32
    return %arg0, %c0_i32 : i32, i32
  }
  func.func @transform_1(%arg0: i32) -> (i32, i32) {
    %c0_i32 = arith.constant 0 : i32
    %c0_i32_0 = arith.constant 0 : i32
    %c0_i32_1 = arith.constant 0 : i32
    return %c0_i32, %c0_i32_0 : i32, i32
  }
  func.func @transform_2(%arg0: i32) -> (i32, i32) {
    %c0_i32 = arith.constant 0 : i32
    %c0_i32_0 = arith.constant 0 : i32
    %c0_i32_1 = arith.constant 0 : i32
    return %c0_i32, %c0_i32_0 : i32, i32
  }
  func.func @transform_3(%arg0: i32) -> (i32, i32) {
    %c0_i32 = arith.constant 0 : i32
    %c0_i32_0 = arith.constant 0 : i32
    return %arg0, %c0_i32 : i32, i32
  }
}

</mosaic_0001>

<llo_original>
// kernel: tpu_custom_call.1
$region0: #{tpu_custom_call.1}
  #allocation0 [shape = 'u32[]', space=smem, size = 0x4, offset = 0x4, fixed_abs, tag = 'smem constant byte address 0x4 - core index']
  #allocation1 [shape = 'u32[144,128]{1,0:T(1,128)}', space=vmem, size = 0x12000, scoped, tag = 'internal scratch']
  %s0 = inlined_call_operand.hbm [shape: f32[64,1024], index: 0, kind: input, shape index: {}]
  %s1 = inlined_call_operand.hbm [shape: f32[1,1024], index: 1, kind: input, shape index: {}]
  %s2 = inlined_call_operand.hbm [shape: f32[1,1024], index: 2, kind: input, shape index: {}]
  %s3 = inlined_call_operand.hbm [shape: f32[64,1024], index: 3, kind: output, shape index: {}]
  %s4 = sld [smem:[#allocation0]]
  $region34: #{tpu_custom_call.1} parent=0
    _
  %s6 = ssub.s32 1, %s4
  %s7 = scalar_select 0, %s6, %s4
  $region1: #{tpu_custom_call.1} parent=0
    #allocation2 [shape = 'u8[262144]{0}', space=vmem, size = 0x40000, scoped, tag = 'input window, operand 0, single buffered']
    #allocation3 [shape = 's32[1]{0}', space=sflag, size = 0x4, scoped, tag = 'scoped memory for tpu_custom_call.1']
    #allocation4 [shape = 's32[1]{0}', space=sflag, size = 0x4, scoped, tag = 'scoped memory for tpu_custom_call.1']
    #allocation5 [shape = 'u8[4096]{0}', space=vmem, size = 0x1000, scoped, tag = 'input window, operand 1, single buffered']
    #allocation6 [shape = 's32[1]{0}', space=sflag, size = 0x4, scoped, tag = 'scoped memory for tpu_custom_call.1']
    #allocation7 [shape = 'u8[4096]{0}', space=vmem, size = 0x1000, scoped, tag = 'input window, operand 2, single buffered']
    #allocation8 [shape = 'u8[262144]{0}', space=vmem, size = 0x40000, scoped, tag = 'output window, operand 0, single buffered']
    %8 = vsyncpa [#allocation3], 0
    %9 = vsyncpa [#allocation6], 0
    %10 = vsyncpa [#allocation4], 0
    // Predicated region
    $region2: #{tpu_custom_call.1} parent=1 // pred_check
      _
    $region3: #{tpu_custom_call.1} parent=1 // pred_check_branch
      %12 = sbr.rel (0) target = $region5
    $region4: #{tpu_custom_call.1} parent=1 // pred_region
      %s14 = ssub.s32 8192, 8192
      %15 = vsyncadd [#allocation3], %s14
      %s16 = sshll.u32 [#allocation2], 4
      %s17 = int_to_ptr.vmem [resolvable:$true] %s16
      %22 = dma.hbm_to_vmem [thread:$0]  %s0, 8192, %s17, [#allocation3], 1024, 1024, 64
    $region5: #{tpu_custom_call.1} parent=1 // pred_fallthru
      _
    // Predicated region
    $region6: #{tpu_custom_call.1} parent=1 // pred_check
      _
    $region7: #{tpu_custom_call.1} parent=1 // pred_check_branch
      %24 = sbr.rel (0) target = $region9
    $region8: #{tpu_custom_call.1} parent=1 // pred_region
      %s26 = ssub.s32 128, 128
      %27 = vsyncadd [#allocation6], %s26
      %s29 = sshll.u32 [#allocation5], 4
      %s30 = int_to_ptr.vmem [resolvable:$true] %s29
      %32 = dma.hbm_to_vmem [thread:$0]  %s1, 128, %s30, [#allocation6]
    $region9: #{tpu_custom_call.1} parent=1 // pred_fallthru
      _
    // Predicated region
    $region10: #{tpu_custom_call.1} parent=1 // pred_check
      _
    $region11: #{tpu_custom_call.1} parent=1 // pred_check_branch
      %34 = sbr.rel (0) target = $region13
    $region12: #{tpu_custom_call.1} parent=1 // pred_region
      %s36 = ssub.s32 128, 128
      %37 = vsyncadd [#allocation6], %s36
      %s39 = sshll.u32 [#allocation7], 4
      %s40 = int_to_ptr.vmem [resolvable:$true] %s39
      %42 = dma.hbm_to_vmem [thread:$0]  %s2, 128, %s40, [#allocation6]
    $region13: #{tpu_custom_call.1} parent=1 // pred_fallthru
      _
    // Predicated region
    $region14: #{tpu_custom_call.1} parent=1 // pred_check
      _
    $region15: #{tpu_custom_call.1} parent=1 // pred_check_branch
      %44 = sbr.rel (0) target = $region17
    $region16: #{tpu_custom_call.1} parent=1 // pred_region
      %45 = dma.done [#allocation3], 8192
    $region17: #{tpu_custom_call.1} parent=1 // pred_fallthru
      _
    // Predicated region
    $region18: #{tpu_custom_call.1} parent=1 // pred_check
      _
    $region19: #{tpu_custom_call.1} parent=1 // pred_check_branch
      %47 = sbr.rel (0) target = $region21
    $region20: #{tpu_custom_call.1} parent=1 // pred_region
      %48 = dma.done [#allocation6], 128
    $region21: #{tpu_custom_call.1} parent=1 // pred_fallthru
      _
    // Predicated region
    $region22: #{tpu_custom_call.1} parent=1 // pred_check
      _
    $region23: #{tpu_custom_call.1} parent=1 // pred_check_branch
      %50 = sbr.rel (0) target = $region25
    $region24: #{tpu_custom_call.1} parent=1 // pred_region
      %51 = dma.done [#allocation6], 128
    $region25: #{tpu_custom_call.1} parent=1 // pred_fallthru
      _
    %v52 = vld [vmem:[#allocation2] sm:$0xff]
    %v53 = vld [vmem:[#allocation2 + $0x8] sm:$0xff]
    %v54 = vld [vmem:[#allocation2 + $0x10] sm:$0xff]
    %v55 = vld [vmem:[#allocation2 + $0x18] sm:$0xff]
    %v56 = vld [vmem:[#allocation2 + $0x20] sm:$0xff]
    %v57 = vld [vmem:[#allocation2 + $0x28] sm:$0xff]
    %v58 = vld [vmem:[#allocation2 + $0x30] sm:$0xff]
    %v59 = vld [vmem:[#allocation2 + $0x38] sm:$0xff]
    %v60 = vld [vmem:[#allocation2 + $0x40] sm:$0xff]
    %v61 = vld [vmem:[#allocation2 + $0x48] sm:$0xff]
    %v62 = vld [vmem:[#allocation2 + $0x50] sm:$0xff]
    %v63 = vld [vmem:[#allocation2 + $0x58] sm:$0xff]
    %v64 = vld [vmem:[#allocation2 + $0x60] sm:$0xff]
    %v65 = vld [vmem:[#allocation2 + $0x68] sm:$0xff]
    %v66 = vld [vmem:[#allocation2 + $0x70] sm:$0xff]
    %v67 = vld [vmem:[#allocation2 + $0x78] sm:$0xff]
    %v68 = vld [vmem:[#allocation2 + $0x80] sm:$0xff]
    %v69 = vld [vmem:[#allocation2 + $0x88] sm:$0xff]
    %v70 = vld [vmem:[#allocation2 + $0x90] sm:$0xff]
    %v71 = vld [vmem:[#allocation2 + $0x98] sm:$0xff]
    %v72 = vld [vmem:[#allocation2 + $0xa0] sm:$0xff]
    %v73 = vld [vmem:[#allocation2 + $0xa8] sm:$0xff]
    %v74 = vld [vmem:[#allocation2 + $0xb0] sm:$0xff]
    %v75 = vld [vmem:[#allocation2 + $0xb8] sm:$0xff]
    %v76 = vld [vmem:[#allocation2 + $0xc0] sm:$0xff]
    %v77 = vld [vmem:[#allocation2 + $0xc8] sm:$0xff]
    %v78 = vld [vmem:[#allocation2 + $0xd0] sm:$0xff]
    %v79 = vld [vmem:[#allocation2 + $0xd8] sm:$0xff]
    %v80 = vld [vmem:[#allocation2 + $0xe0] sm:$0xff]
    %v81 = vld [vmem:[#allocation2 + $0xe8] sm:$0xff]
    %v82 = vld [vmem:[#allocation2 + $0xf0] sm:$0xff]
    %v83 = vld [vmem:[#allocation2 + $0xf8] sm:$0xff]
    %v84 = vld [vmem:[#allocation2 + $0x100] sm:$0xff]
    %v85 = vld [vmem:[#allocation2 + $0x108] sm:$0xff]
    %v86 = vld [vmem:[#allocation2 + $0x110] sm:$0xff]
    %v87 = vld [vmem:[#allocation2 + $0x118] sm:$0xff]
    %v88 = vld [vmem:[#allocation2 + $0x120] sm:$0xff]
    %v89 = vld [vmem:[#allocation2 + $0x128] sm:$0xff]
    %v90 = vld [vmem:[#allocation2 + $0x130] sm:$0xff]
    %v91 = vld [vmem:[#allocation2 + $0x138] sm:$0xff]
    %v92 = vld [vmem:[#allocation2 + $0x140] sm:$0xff]
    %v93 = vld [vmem:[#allocation2 + $0x148] sm:$0xff]
    %v94 = vld [vmem:[#allocation2 + $0x150] sm:$0xff]
    %v95 = vld [vmem:[#allocation2 + $0x158] sm:$0xff]
    %v96 = vld [vmem:[#allocation2 + $0x160] sm:$0xff]
    %v97 = vld [vmem:[#allocation2 + $0x168] sm:$0xff]
    %v98 = vld [vmem:[#allocation2 + $0x170] sm:$0xff]
    %v99 = vld [vmem:[#allocation2 + $0x178] sm:$0xff]
    %v100 = vld [vmem:[#allocation2 + $0x180] sm:$0xff]
    %v101 = vld [vmem:[#allocation2 + $0x188] sm:$0xff]
    %v102 = vld [vmem:[#allocation2 + $0x190] sm:$0xff]
    %v103 = vld [vmem:[#allocation2 + $0x198] sm:$0xff]
    %v104 = vld [vmem:[#allocation2 + $0x1a0] sm:$0xff]
    %v105 = vld [vmem:[#allocation2 + $0x1a8] sm:$0xff]
    %v106 = vld [vmem:[#allocation2 + $0x1b0] sm:$0xff]
    %v107 = vld [vmem:[#allocation2 + $0x1b8] sm:$0xff]
    %v108 = vld [vmem:[#allocation2 + $0x1c0] sm:$0xff]
    %v109 = vld [vmem:[#allocation2 + $0x1c8] sm:$0xff]
    %v110 = vld [vmem:[#allocation2 + $0x1d0] sm:$0xff]
    %v111 = vld [vmem:[#allocation2 + $0x1d8] sm:$0xff]
    %v112 = vld [vmem:[#allocation2 + $0x1e0] sm:$0xff]
    %v113 = vld [vmem:[#allocation2 + $0x1e8] sm:$0xff]
    %v114 = vld [vmem:[#allocation2 + $0x1f0] sm:$0xff]
    %v115 = vld [vmem:[#allocation2 + $0x1f8] sm:$0xff]
    %v116 = vld [vmem:[#allocation5] sm:$0xff]
    %v117 = vld [vmem:[#allocation7] sm:$0xff]
    %v119 = vlaneseq
    %v120 = vshrl.u32 %v119, 7
    %v121 = vsub.s32 0, %v120
    %v122 = vrot.slane %v116, %v121
    %v123 = vlaneseq
    %v124 = vshrl.u32 %v123, 7
    %v125 = vsub.s32 1, %v124
    %v126 = vrot.slane %v116, %v125
    %v127 = vlaneseq
    %v128 = vshrl.u32 %v127, 7
    %v129 = vsub.s32 2, %v128
    %v130 = vrot.slane %v116, %v129
    %v131 = vlaneseq
    %v132 = vshrl.u32 %v131, 7
    %v133 = vsub.s32 3, %v132
    %v134 = vrot.slane %v116, %v133
    %v135 = vlaneseq
    %v136 = vshrl.u32 %v135, 7
    %v137 = vsub.s32 4, %v136
    %v138 = vrot.slane %v116, %v137
    %v139 = vlaneseq
    %v140 = vshrl.u32 %v139, 7
    %v141 = vsub.s32 5, %v140
    %v142 = vrot.slane %v116, %v141
    %v143 = vlaneseq
    %v144 = vshrl.u32 %v143, 7
    %v145 = vsub.s32 6, %v144
    %v146 = vrot.slane %v116, %v145
    %v147 = vlaneseq
    %v148 = vshrl.u32 %v147, 7
    %v149 = vsub.s32 7, %v148
    %v150 = vrot.slane %v116, %v149
    %v159 = vmul.f32 %v52, %v122
    %v160 = vmul.f32 %v53, %v126
    %v161 = vmul.f32 %v54, %v130
    %v162 = vmul.f32 %v55, %v134
    %v163 = vmul.f32 %v56, %v138
    %v164 = vmul.f32 %v57, %v142
    %v165 = vmul.f32 %v58, %v146
    %v166 = vmul.f32 %v59, %v150
    %v167 = vmul.f32 %v60, %v122
    %v168 = vmul.f32 %v61, %v126
    %v169 = vmul.f32 %v62, %v130
    %v170 = vmul.f32 %v63, %v134
    %v171 = vmul.f32 %v64, %v138
    %v172 = vmul.f32 %v65, %v142
    %v173 = vmul.f32 %v66, %v146
    %v174 = vmul.f32 %v67, %v150
    %v175 = vmul.f32 %v68, %v122
    %v176 = vmul.f32 %v69, %v126
    %v177 = vmul.f32 %v70, %v130
    %v178 = vmul.f32 %v71, %v134
    %v179 = vmul.f32 %v72, %v138
    %v180 = vmul.f32 %v73, %v142
    %v181 = vmul.f32 %v74, %v146
    %v182 = vmul.f32 %v75, %v150
    %v183 = vmul.f32 %v76, %v122
    %v184 = vmul.f32 %v77, %v126
    %v185 = vmul.f32 %v78, %v130
    %v186 = vmul.f32 %v79, %v134
    %v187 = vmul.f32 %v80, %v138
    %v188 = vmul.f32 %v81, %v142
    %v189 = vmul.f32 %v82, %v146
    %v190 = vmul.f32 %v83, %v150
    %v191 = vmul.f32 %v84, %v122
    %v192 = vmul.f32 %v85, %v126
    %v193 = vmul.f32 %v86, %v130
    %v194 = vmul.f32 %v87, %v134
    %v195 = vmul.f32 %v88, %v138
    %v196 = vmul.f32 %v89, %v142
    %v197 = vmul.f32 %v90, %v146
    %v198 = vmul.f32 %v91, %v150
    %v199 = vmul.f32 %v92, %v122
    %v200 = vmul.f32 %v93, %v126
    %v201 = vmul.f32 %v94, %v130
    %v202 = vmul.f32 %v95, %v134
    %v203 = vmul.f32 %v96, %v138
    %v204 = vmul.f32 %v97, %v142
    %v205 = vmul.f32 %v98, %v146
    %v206 = vmul.f32 %v99, %v150
    %v207 = vmul.f32 %v100, %v122
    %v208 = vmul.f32 %v101, %v126
    %v209 = vmul.f32 %v102, %v130
    %v210 = vmul.f32 %v103, %v134
    %v211 = vmul.f32 %v104, %v138
    %v212 = vmul.f32 %v105, %v142
    %v213 = vmul.f32 %v106, %v146
    %v214 = vmul.f32 %v107, %v150
    %v215 = vmul.f32 %v108, %v122
    %v216 = vmul.f32 %v109, %v126
    %v217 = vmul.f32 %v110, %v130
    %v218 = vmul.f32 %v111, %v134
    %v219 = vmul.f32 %v112, %v138
    %v220 = vmul.f32 %v113, %v142
    %v221 = vmul.f32 %v114, %v146
    %v222 = vmul.f32 %v115, %v150
    %v224 = vlaneseq
    %v225 = vshrl.u32 %v224, 7
    %v226 = vsub.s32 0, %v225
    %v227 = vrot.slane %v117, %v226
    %v228 = vlaneseq
    %v229 = vshrl.u32 %v228, 7
    %v230 = vsub.s32 1, %v229
    %v231 = vrot.slane %v117, %v230
    %v232 = vlaneseq
    %v233 = vshrl.u32 %v232, 7
    %v234 = vsub.s32 2, %v233
    %v235 = vrot.slane %v117, %v234
    %v236 = vlaneseq
    %v237 = vshrl.u32 %v236, 7
    %v238 = vsub.s32 3, %v237
    %v239 = vrot.slane %v117, %v238
    %v240 = vlaneseq
    %v241 = vshrl.u32 %v240, 7
    %v242 = vsub.s32 4, %v241
    %v243 = vrot.slane %v117, %v242
    %v244 = vlaneseq
    %v245 = vshrl.u32 %v244, 7
    %v246 = vsub.s32 5, %v245
    %v247 = vrot.slane %v117, %v246
    %v248 = vlaneseq
    %v249 = vshrl.u32 %v248, 7
    %v250 = vsub.s32 6, %v249
    %v251 = vrot.slane %v117, %v250
    %v252 = vlaneseq
    %v253 = vshrl.u32 %v252, 7
    %v254 = vsub.s32 7, %v253
    %v255 = vrot.slane %v117, %v254
    %v264 = vadd.f32 %v159, %v227
    %v265 = vadd.f32 %v160, %v231
    %v266 = vadd.f32 %v161, %v235
    %v267 = vadd.f32 %v162, %v239
    %v268 = vadd.f32 %v163, %v243
    %v269 = vadd.f32 %v164, %v247
    %v270 = vadd.f32 %v165, %v251
    %v271 = vadd.f32 %v166, %v255
    %v272 = vadd.f32 %v167, %v227
    %v273 = vadd.f32 %v168, %v231
    %v274 = vadd.f32 %v169, %v235
    %v275 = vadd.f32 %v170, %v239
    %v276 = vadd.f32 %v171, %v243
    %v277 = vadd.f32 %v172, %v247
    %v278 = vadd.f32 %v173, %v251
    %v279 = vadd.f32 %v174, %v255
    %v280 = vadd.f32 %v175, %v227
    %v281 = vadd.f32 %v176, %v231
    %v282 = vadd.f32 %v177, %v235
    %v283 = vadd.f32 %v178, %v239
    %v284 = vadd.f32 %v179, %v243
    %v285 = vadd.f32 %v180, %v247
    %v286 = vadd.f32 %v181, %v251
    %v287 = vadd.f32 %v182, %v255
    %v288 = vadd.f32 %v183, %v227
    %v289 = vadd.f32 %v184, %v231
    %v290 = vadd.f32 %v185, %v235
    %v291 = vadd.f32 %v186, %v239
    %v292 = vadd.f32 %v187, %v243
    %v293 = vadd.f32 %v188, %v247
    %v294 = vadd.f32 %v189, %v251
    %v295 = vadd.f32 %v190, %v255
    %v296 = vadd.f32 %v191, %v227
    %v297 = vadd.f32 %v192, %v231
    %v298 = vadd.f32 %v193, %v235
    %v299 = vadd.f32 %v194, %v239
    %v300 = vadd.f32 %v195, %v243
    %v301 = vadd.f32 %v196, %v247
    %v302 = vadd.f32 %v197, %v251
    %v303 = vadd.f32 %v198, %v255
    %v304 = vadd.f32 %v199, %v227
    %v305 = vadd.f32 %v200, %v231
    %v306 = vadd.f32 %v201, %v235
    %v307 = vadd.f32 %v202, %v239
    %v308 = vadd.f32 %v203, %v243
    %v309 = vadd.f32 %v204, %v247
    %v310 = vadd.f32 %v205, %v251
    %v311 = vadd.f32 %v206, %v255
    %v312 = vadd.f32 %v207, %v227
    %v313 = vadd.f32 %v208, %v231
    %v314 = vadd.f32 %v209, %v235
    %v315 = vadd.f32 %v210, %v239
    %v316 = vadd.f32 %v211, %v243
    %v317 = vadd.f32 %v212, %v247
    %v318 = vadd.f32 %v213, %v251
    %v319 = vadd.f32 %v214, %v255
    %v320 = vadd.f32 %v215, %v227
    %v321 = vadd.f32 %v216, %v231
    %v322 = vadd.f32 %v217, %v235
    %v323 = vadd.f32 %v218, %v239
    %v324 = vadd.f32 %v219, %v243
    %v325 = vadd.f32 %v220, %v247
    %v326 = vadd.f32 %v221, %v251
    %v327 = vadd.f32 %v222, %v255
    %328 = vst [vmem:[#allocation8] sm:$0xff] %v264
    %329 = vst [vmem:[#allocation8 + $0x8] sm:$0xff] %v265
    %330 = vst [vmem:[#allocation8 + $0x10] sm:$0xff] %v266
    %331 = vst [vmem:[#allocation8 + $0x18] sm:$0xff] %v267
    %332 = vst [vmem:[#allocation8 + $0x20] sm:$0xff] %v268
    %333 = vst [vmem:[#allocation8 + $0x28] sm:$0xff] %v269
    %334 = vst [vmem:[#allocation8 + $0x30] sm:$0xff] %v270
    %335 = vst [vmem:[#allocation8 + $0x38] sm:$0xff] %v271
    %336 = vst [vmem:[#allocation8 + $0x40] sm:$0xff] %v272
    %337 = vst [vmem:[#allocation8 + $0x48] sm:$0xff] %v273
    %338 = vst [vmem:[#allocation8 + $0x50] sm:$0xff] %v274
    %339 = vst [vmem:[#allocation8 + $0x58] sm:$0xff] %v275
    %340 = vst [vmem:[#allocation8 + $0x60] sm:$0xff] %v276
    %341 = vst [vmem:[#allocation8 + $0x68] sm:$0xff] %v277
    %342 = vst [vmem:[#allocation8 + $0x70] sm:$0xff] %v278
    %343 = vst [vmem:[#allocation8 + $0x78] sm:$0xff] %v279
    %344 = vst [vmem:[#allocation8 + $0x80] sm:$0xff] %v280
    %345 = vst [vmem:[#allocation8 + $0x88] sm:$0xff] %v281
    %346 = vst [vmem:[#allocation8 + $0x90] sm:$0xff] %v282
    %347 = vst [vmem:[#allocation8 + $0x98] sm:$0xff] %v283
    %348 = vst [vmem:[#allocation8 + $0xa0] sm:$0xff] %v284
    %349 = vst [vmem:[#allocation8 + $0xa8] sm:$0xff] %v285
    %350 = vst [vmem:[#allocation8 + $0xb0] sm:$0xff] %v286
    %351 = vst [vmem:[#allocation8 + $0xb8] sm:$0xff] %v287
    %352 = vst [vmem:[#allocation8 + $0xc0] sm:$0xff] %v288
    %353 = vst [vmem:[#allocation8 + $0xc8] sm:$0xff] %v289
    %354 = vst [vmem:[#allocation8 + $0xd0] sm:$0xff] %v290
    %355 = vst [vmem:[#allocation8 + $0xd8] sm:$0xff] %v291
    %356 = vst [vmem:[#allocation8 + $0xe0] sm:$0xff] %v292
    %357 = vst [vmem:[#allocation8 + $0xe8] sm:$0xff] %v293
    %358 = vst [vmem:[#allocation8 + $0xf0] sm:$0xff] %v294
    %359 = vst [vmem:[#allocation8 + $0xf8] sm:$0xff] %v295
    %360 = vst [vmem:[#allocation8 + $0x100] sm:$0xff] %v296
    %361 = vst [vmem:[#allocation8 + $0x108] sm:$0xff] %v297
    %362 = vst [vmem:[#allocation8 + $0x110] sm:$0xff] %v298
    %363 = vst [vmem:[#allocation8 + $0x118] sm:$0xff] %v299
    %364 = vst [vmem:[#allocation8 + $0x120] sm:$0xff] %v300
    %365 = vst [vmem:[#allocation8 + $0x128] sm:$0xff] %v301
    %366 = vst [vmem:[#allocation8 + $0x130] sm:$0xff] %v302
    %367 = vst [vmem:[#allocation8 + $0x138] sm:$0xff] %v303
    %368 = vst [vmem:[#allocation8 + $0x140] sm:$0xff] %v304
    %369 = vst [vmem:[#allocation8 + $0x148] sm:$0xff] %v305
    %370 = vst [vmem:[#allocation8 + $0x150] sm:$0xff] %v306
    %371 = vst [vmem:[#allocation8 + $0x158] sm:$0xff] %v307
    %372 = vst [vmem:[#allocation8 + $0x160] sm:$0xff] %v308
    %373 = vst [vmem:[#allocation8 + $0x168] sm:$0xff] %v309
    %374 = vst [vmem:[#allocation8 + $0x170] sm:$0xff] %v310
    %375 = vst [vmem:[#allocation8 + $0x178] sm:$0xff] %v311
    %376 = vst [vmem:[#allocation8 + $0x180] sm:$0xff] %v312
    %377 = vst [vmem:[#allocation8 + $0x188] sm:$0xff] %v313
    %378 = vst [vmem:[#allocation8 + $0x190] sm:$0xff] %v314
    %379 = vst [vmem:[#allocation8 + $0x198] sm:$0xff] %v315
    %380 = vst [vmem:[#allocation8 + $0x1a0] sm:$0xff] %v316
    %381 = vst [vmem:[#allocation8 + $0x1a8] sm:$0xff] %v317
    %382 = vst [vmem:[#allocation8 + $0x1b0] sm:$0xff] %v318
    %383 = vst [vmem:[#allocation8 + $0x1b8] sm:$0xff] %v319
    %384 = vst [vmem:[#allocation8 + $0x1c0] sm:$0xff] %v320
    %385 = vst [vmem:[#allocation8 + $0x1c8] sm:$0xff] %v321
    %386 = vst [vmem:[#allocation8 + $0x1d0] sm:$0xff] %v322
    %387 = vst [vmem:[#allocation8 + $0x1d8] sm:$0xff] %v323
    %388 = vst [vmem:[#allocation8 + $0x1e0] sm:$0xff] %v324
    %389 = vst [vmem:[#allocation8 + $0x1e8] sm:$0xff] %v325
    %390 = vst [vmem:[#allocation8 + $0x1f0] sm:$0xff] %v326
    %391 = vst [vmem:[#allocation8 + $0x1f8] sm:$0xff] %v327
    // Predicated region
    $region26: #{tpu_custom_call.1} parent=1 // pred_check
      _
    $region27: #{tpu_custom_call.1} parent=1 // pred_check_branch
      %393 = sbr.rel (0) target = $region29
    $region28: #{tpu_custom_call.1} parent=1 // pred_region
      %s395 = ssub.s32 8192, 8192
      %396 = vsyncadd [#allocation4], %s395
      %s397 = sshll.u32 [#allocation8], 4
      %s398 = int_to_ptr.vmem [resolvable:$true] %s397
      %403 = dma.vmem_to_hbm [thread:$0]  %s398, 8192, %s3, [#allocation4], 1024, 1024, 64
    $region29: #{tpu_custom_call.1} parent=1 // pred_fallthru
      _
    // Predicated region
    $region30: #{tpu_custom_call.1} parent=1 // pred_check
      _
    $region31: #{tpu_custom_call.1} parent=1 // pred_check_branch
      %405 = sbr.rel (0) target = $region33
    $region32: #{tpu_custom_call.1} parent=1 // pred_region
      %406 = dma.done [#allocation4], 8192
    $region33: #{tpu_custom_call.1} parent=1 // pred_fallthru
      _
    %407 = vsyncpa [#allocation3], 1
    %408 = vsyncpa [#allocation6], 1
    %409 = vsyncpa [#allocation4], 1

</llo_original>
